<compile_context>
chip_gen: v7x
topology: tpu7x:2x2x1
jax: 0.10.0
libtpu: 0.0.40
codegen_flags: <defaults>
</compile_context>

<pallas_src>
import jax
import jax.numpy as jnp
import numpy as np
from jax.experimental import pallas as pl
from jax.experimental.pallas import tpu as pltpu


def _cdiv(a, b):
    return -(-a // b)


def _round_up(x, m):
    return _cdiv(x, m) * m


def _gmf_kernel(ue_ref, ie_ref, selw_ref, out_ref, ssq_u_ref, ssq_i_ref):
    """One batch tile in the lane-dense layout.

    ue_ref/ie_ref : [TBr, LANE]  (R = LANE // D packed examples per lane row)
    selw_ref      : [LANE, R]    block-diagonal selector with the constrained
                                 Linear weight folded in (VMEM-resident)
    out_ref       : [TBr, R]     out[r, j] = sum_d w[d]*ue[b,d]*ie[b,d], b=r*R+j
    ssq_*_ref     : [1, 1, LANE] per-tile lane partials of sum(x**2) (regs)
    """
    ue = ue_ref[...]
    ie = ie_ref[...]
    prod = ue * ie                                   # VPU, full 128-lane width

    # Weighted segmented reduction over each D-lane group on the (idle) MXU.
    out_ref[...] = jnp.dot(prod, selw_ref[...],
                           precision=jax.lax.Precision.HIGHEST,
                           preferred_element_type=jnp.float32)        # [TBr, R]

    # Frobenius-norm partials (pad rows were zeroed upstream -> contribute 0).
    lane = ue.shape[1]
    ssq_u_ref[...] = jnp.sum(ue * ue, axis=0, keepdims=True).reshape(1, 1, lane)
    ssq_i_ref[...] = jnp.sum(ie * ie, axis=0, keepdims=True).reshape(1, 1, lane)


def _gmf_forward_impl(users, items, users_ratings, items_ratings, params, reg,
                      batch_tile=8192):
    # GMF.forward ignores the ratings histories (kept for API parity).
    del users_ratings, items_ratings

    users_emb = params["users_emb"].astype(jnp.float32)      # [num_users, D]
    items_emb = params["items_emb"].astype(jnp.float32)      # [num_items, D]
    w = params["W1"].astype(jnp.float32)                      # [1, D]
    B = users.shape[0]
    D = users_emb.shape[1]

    # constrain(): row-wise L2-norm clamp of the [1, D] weight (functional
    # version of the in-place parameter mutation).
    w_norm = jnp.sqrt(jnp.sum(w * w, axis=1, keepdims=True))
    w_c = w / jnp.maximum(w_norm, 1.0)

    # Lane fold: pack R = 128 // D examples per 128-lane row (D=32 -> R=4).
    R = 128 // D if (D < 128 and 128 % D == 0) else 1
    LANE = D * R

    # Batch tiling over lane rows: TBr multiple of 8 (sublane); multiple of
    # 128 whenever the grid has more than one step (keeps blocks lane/sublane
    # aligned regardless of the user-supplied batch_tile).
    rows = _cdiv(B, R)
    tile_rows = max(batch_tile // R, 8)
    if rows <= tile_rows:
        TBr, G = _round_up(rows, 8), 1
    else:
        TBr = _round_up(tile_rows, 128)
        G = _cdiv(rows, TBr)
    Bpr = G * TBr
    Bp = Bpr * R

    # Pad the (tiny) int index vectors, not the gathered activations; mask the
    # pad rows to zero so the in-kernel sum-of-squares (regs) stays exact.
    users_p = jnp.zeros((Bp,), users.dtype).at[:B].set(users)
    items_p = jnp.zeros((Bp,), items.dtype).at[:B].set(items)
    valid = (jnp.arange(Bp) < B)[:, None]
    ue = jnp.where(valid, jnp.take(users_emb, users_p, axis=0), 0.0)   # [Bp, D]
    ie = jnp.where(valid, jnp.take(items_emb, items_p, axis=0), 0.0)
    # Free row-major reshape -> lane-dense [Bpr, LANE] (R examples per row).
    ue = ue.reshape(Bpr, LANE)
    ie = ie.reshape(Bpr, LANE)
    # TODO(synk): on v5e, stream ue/ie as bf16 with an in-kernel f32 upcast to
    # halve HBM traffic if reduced embedding precision is acceptable.

    # Block-diagonal selector with the constrained weight folded in:
    #   selw[l, j] = w_c[l % D] if (l // D == j) else 0
    lane_ids = jnp.arange(LANE)
    w_rep = jnp.tile(w_c[0], (R,))                                      # [LANE]
    selw = jnp.where((lane_ids // D)[:, None] == jnp.arange(R)[None, :],
                     w_rep[:, None], 0.0).astype(jnp.float32)           # [LANE, R]

    # Double-buffered inputs + headroom; capped under v7x's 64 MiB/core VMEM.
    vmem_limit = int(min(56 * 2**20, max(32 * 2**20, 6 * TBr * LANE * 4)))

    out, ssq_u, ssq_i = pl.pallas_call(
        _gmf_kernel,
        out_shape=(
            jax.ShapeDtypeStruct((Bpr, R), jnp.float32),      # weighted reduce
            jax.ShapeDtypeStruct((G, 1, LANE), jnp.float32),  # ||ue||^2 partials
            jax.ShapeDtypeStruct((G, 1, LANE), jnp.float32),  # ||ie||^2 partials
        ),
        grid=(G,),
        in_specs=[
            pl.BlockSpec((TBr, LANE), lambda i: (i, 0)),   # ue tile (streamed)
            pl.BlockSpec((TBr, LANE), lambda i: (i, 0)),   # ie tile (streamed)
            pl.BlockSpec((LANE, R), lambda i: (0, 0)),     # selector (resident)
        ],
        out_specs=(
            pl.BlockSpec((TBr, R), lambda i: (i, 0)),
            pl.BlockSpec((1, 1, LANE), lambda i: (i, 0, 0)),
            pl.BlockSpec((1, 1, LANE), lambda i: (i, 0, 0)),
        ),
        compiler_params=pltpu.CompilerParams(
            dimension_semantics=("parallel",),     # shard batch tiles across TCs (v7x)
            vmem_limit_bytes=vmem_limit),
    )(ue, ie, selw)

    inference = out.reshape(Bp, 1)[:B]                       # [B, 1]
    regs = reg * (jnp.sqrt(jnp.sum(ssq_u)) + jnp.sqrt(jnp.sum(ssq_i)))
    return inference, regs


gmf_forward = jax.jit(_gmf_forward_impl, static_argnames=("batch_tile",))


def gmf_forward_ref(users, items, users_ratings, items_ratings, params, reg):
    """Pure-JAX reference mirroring the PyTorch forward (for verification)."""
    del users_ratings, items_ratings
    ue = params["users_emb"][users]
    ie = params["items_emb"][items]
    w = params["W1"]
    w_c = w / jnp.maximum(jnp.linalg.norm(w, axis=1, keepdims=True), 1.0)
    out1 = ue * ie
    inference = jnp.sum(out1 * w_c, axis=1, keepdims=True)   # Linear(D->1), then identity sum
    regs = reg * (jnp.linalg.norm(ue) + jnp.linalg.norm(ie))
    return inference, regs


def make_params(key, num_users, num_items, embedding_dim):
    """Deterministic synthetic parameters matching the module's shapes."""
    D = embedding_dim
    ks = jax.random.split(key, 5)
    users_emb = jax.random.normal(ks[0], (num_users, D), jnp.float32)
    items_emb = jax.random.normal(ks[1], (num_items, D), jnp.float32)
    # ratings tables exist on the module (padding_idx=0) but are unused by GMF.forward
    users_ratings_emb = jax.random.normal(ks[2], (num_items + 1, D), jnp.float32).at[0].set(0.0)
    items_ratings_emb = jax.random.normal(ks[3], (num_users + 1, D), jnp.float32).at[0].set(0.0)
    W1 = jax.random.normal(ks[4], (1, D), jnp.float32) * (1.0 / jnp.sqrt(jnp.float32(D)))
    return dict(users_emb=users_emb, items_emb=items_emb,
                users_ratings_emb=users_ratings_emb,
                items_ratings_emb=items_ratings_emb, W1=W1)


if __name__ == "__main__":
    num_users, num_items = 20, 30
    embedding_dim = 32
    reg = 0.01

    key = jax.random.PRNGKey(0)
    pkey, k_u, k_i, k_ur, k_ir = jax.random.split(key, 5)
    params = make_params(pkey, num_users, num_items, embedding_dim)

    # --- small demo batch (single tile, lane-fold R=4) ---
    B, Lu, Li = 8, 5, 7
    users = jax.random.randint(k_u, (B,), 0, num_users)
    items = jax.random.randint(k_i, (B,), 0, num_items)
    users_ratings = jax.random.randint(k_ur, (B, Lu), 0, num_items + 1)  # unused by GMF
    items_ratings = jax.random.randint(k_ir, (B, Li), 0, num_users + 1)  # unused by GMF

    inference, regs = gmf_forward(users, items, users_ratings, items_ratings,
                                  params, reg)
    jax.block_until_ready((inference, regs))

    inf_ref, regs_ref = gmf_forward_ref(users, items, users_ratings,
                                        items_ratings, params, reg)
    assert inference.shape == (B, 1)
    np.testing.assert_allclose(np.asarray(inference), np.asarray(inf_ref),
                               rtol=1e-4, atol=1e-5)
    np.testing.assert_allclose(float(regs), float(regs_ref), rtol=1e-4, atol=1e-6)

    # --- larger batch exercising the multi-tile grid + index-padding path ---
    B2 = 1500
    k_u2, k_i2 = jax.random.split(jax.random.PRNGKey(1), 2)
    users2 = jax.random.randint(k_u2, (B2,), 0, num_users)
    items2 = jax.random.randint(k_i2, (B2,), 0, num_items)
    ur2 = jnp.zeros((B2, Lu), jnp.int32)
    ir2 = jnp.zeros((B2, Li), jnp.int32)

    inf2, regs2 = gmf_forward(users2, items2, ur2, ir2, params, reg,
                              batch_tile=512)   # TBr=128 rows -> G=3 grid steps
    jax.block_until_ready((inf2, regs2))
    inf2_ref, regs2_ref = gmf_forward_ref(users2, items2, ur2, ir2, params, reg)
    assert inf2.shape == (B2, 1)
    np.testing.assert_allclose(np.asarray(inf2), np.asarray(inf2_ref),
                               rtol=1e-4, atol=1e-5)
    np.testing.assert_allclose(float(regs2), float(regs2_ref), rtol=1e-4, atol=1e-6)

    print("KERNEL_OK")
</pallas_src>

<mosaic_0001>
module attributes {stable_mosaic.version = 11 : i64} {
  func.func @_gmf_kernel(%arg0: i32, %arg1: memref<8x128xf32, #tpu.memory_space<vmem>>, %arg2: memref<8x128xf32, #tpu.memory_space<vmem>>, %arg3: memref<128x4xf32, #tpu.memory_space<vmem>>, %arg4: memref<8x4xf32, #tpu.memory_space<vmem>>, %arg5: memref<1x1x128xf32, #tpu.memory_space<vmem>>, %arg6: memref<1x1x128xf32, #tpu.memory_space<vmem>>) attributes {dimension_semantics = [#tpu.dimension_semantics<parallel>], iteration_bounds = array<i64: 1>, scalar_prefetch = 0 : i64, scratch_operands = 0 : i64, tpu.core_type = #tpu.core_type<tc>, window_params = [{transform_indices = @transform_0, window_bounds = array<i64: 8, 128>}, {transform_indices = @transform_1, window_bounds = array<i64: 8, 128>}, {pipeline_mode = #tpu.pipeline_mode<synchronous>, transform_indices = @transform_2, window_bounds = array<i64: 128, 4>}, {transform_indices = @transform_3, window_bounds = array<i64: 8, 4>}, {transform_indices = @transform_4, window_bounds = array<i64: 1, 1, 128>}, {transform_indices = @transform_5, window_bounds = array<i64: 1, 1, 128>}]} {
    %c0 = arith.constant 0 : index
    %c0_0 = arith.constant 0 : index
    %0 = vector.load %arg1[%c0, %c0_0] : memref<8x128xf32, #tpu.memory_space<vmem>>, vector<8x128xf32>
    %c0_1 = arith.constant 0 : index
    %c0_2 = arith.constant 0 : index
    %1 = vector.load %arg2[%c0_1, %c0_2] : memref<8x128xf32, #tpu.memory_space<vmem>>, vector<8x128xf32>
    %2 = arith.mulf %0, %1 : vector<8x128xf32>
    %c0_3 = arith.constant 0 : index
    %c0_4 = arith.constant 0 : index
    %3 = vector.load %arg3[%c0_3, %c0_4] : memref<128x4xf32, #tpu.memory_space<vmem>>, vector<128x4xf32>
    %cst = arith.constant dense<0.000000e+00> : vector<8x4xf32>
    %4 = tpu.matmul %2, %3, %cst {dimension_numbers = #tpu.dot_dimension_numbers<[1], [0], [0], [1], [0, 0, 1, 1], [], []>, precision = #tpu.contract_precision<fp32>} : vector<8x128xf32>, vector<128x4xf32>, vector<8x4xf32> -> vector<8x4xf32>
    %c0_5 = arith.constant 0 : index
    %c0_6 = arith.constant 0 : index
    %5 = vector.load %arg4[%c0_5, %c0_6] : memref<8x4xf32, #tpu.memory_space<vmem>>, vector<8x4xf32>
    tpu.vector_store %arg4[%c0_5, %c0_6], %4 {strides = array<i32>} : memref<8x4xf32, #tpu.memory_space<vmem>>, vector<8x4xf32>,
    %6 = arith.mulf %0, %0 : vector<8x128xf32>
    %cst_7 = arith.constant dense<0.000000e+00> : vector<128xf32>
    %7 = vector.multi_reduction <add>, %6, %cst_7 [0] : vector<8x128xf32> to vector<128xf32>
    %8 = vector.shape_cast %7 : vector<128xf32> to vector<1x128xf32>
    %9 = vector.shape_cast %8 : vector<1x128xf32> to vector<1x1x128xf32>
    %c0_8 = arith.constant 0 : index
    %c0_9 = arith.constant 0 : index
    %c0_10 = arith.constant 0 : index
    %10 = vector.load %arg5[%c0_8, %c0_9, %c0_10] : memref<1x1x128xf32, #tpu.memory_space<vmem>>, vector<1x1x128xf32>
    tpu.vector_store %arg5[%c0_8, %c0_9, %c0_10], %9 {strides = array<i32>} : memref<1x1x128xf32, #tpu.memory_space<vmem>>, vector<1x1x128xf32>,
    %11 = arith.mulf %1, %1 : vector<8x128xf32>
    %cst_11 = arith.constant dense<0.000000e+00> : vector<128xf32>
    %12 = vector.multi_reduction <add>, %11, %cst_11 [0] : vector<8x128xf32> to vector<128xf32>
    %13 = vector.shape_cast %12 : vector<128xf32> to vector<1x128xf32>
    %14 = vector.shape_cast %13 : vector<1x128xf32> to vector<1x1x128xf32>
    %c0_12 = arith.constant 0 : index
    %c0_13 = arith.constant 0 : index
    %c0_14 = arith.constant 0 : index
    %15 = vector.load %arg6[%c0_12, %c0_13, %c0_14] : memref<1x1x128xf32, #tpu.memory_space<vmem>>, vector<1x1x128xf32>
    tpu.vector_store %arg6[%c0_12, %c0_13, %c0_14], %14 {strides = array<i32>} : memref<1x1x128xf32, #tpu.memory_space<vmem>>, vector<1x1x128xf32>,
    return
  }
  func.func @transform_0(%arg0: i32) -> (i32, i32) {
    %c0_i32 = arith.constant 0 : i32
    %c0_i32_0 = arith.constant 0 : i32
    return %arg0, %c0_i32 : i32, i32
  }
  func.func @transform_1(%arg0: i32) -> (i32, i32) {
    %c0_i32 = arith.constant 0 : i32
    %c0_i32_0 = arith.constant 0 : i32
    return %arg0, %c0_i32 : i32, i32
  }
  func.func @transform_2(%arg0: i32) -> (i32, i32) {
    %c0_i32 = arith.constant 0 : i32
    %c0_i32_0 = arith.constant 0 : i32
    %c0_i32_1 = arith.constant 0 : i32
    return %c0_i32, %c0_i32_0 : i32, i32
  }
  func.func @transform_3(%arg0: i32) -> (i32, i32) {
    %c0_i32 = arith.constant 0 : i32
    %c0_i32_0 = arith.constant 0 : i32
    return %arg0, %c0_i32 : i32, i32
  }
  func.func @transform_4(%arg0: i32) -> (i32, i32, i32) {
    %c0_i32 = arith.constant 0 : i32
    %c0_i32_0 = arith.constant 0 : i32
    %c0_i32_1 = arith.constant 0 : i32
    return %arg0, %c0_i32, %c0_i32_0 : i32, i32, i32
  }
  func.func @transform_5(%arg0: i32) -> (i32, i32, i32) {
    %c0_i32 = arith.constant 0 : i32
    %c0_i32_0 = arith.constant 0 : i32
    %c0_i32_1 = arith.constant 0 : i32
    return %arg0, %c0_i32, %c0_i32_0 : i32, i32, i32
  }
}

</mosaic_0001>

<llo_original>
// kernel: tile.6
$region0: #{tile.6}
  #allocation0 [shape = 's32[1]{0}', space=sflag, size = 0x4, scoped, tag = 'scoped memory for tile.6']
  %s0 = inlined_call_operand.vmem [shape: f32[32], index: 0, kind: input, shape index: {}]
  %s1 = inlined_call_operand.vmem [shape: f32[4,32], index: 1, kind: output, shape index: {}]
  // Predicated region
  $region2: #{tile.6} parent=0 // pred_check
    _
  $region3: #{tile.6} parent=0 // pred_check_branch
    %3 = sbr.rel (0) target = $region5
  $region4: #{tile.6} parent=0 // pred_region
    _
  $region5: #{tile.6} parent=0 // pred_fallthru
    _
  %v4 = vld [vmem:[%s0] ss:$0 sm:$0xff]
  %5 = vst [vmem:[%s1] sm:$0xf] %v4

// kernel: _gmf_forward_impl.1
$region0: #{_gmf_forward_impl.1}
  #allocation0 [shape = 'u32[]', space=smem, size = 0x4, offset = 0x4, fixed_abs, tag = 'smem constant byte address 0x4 - core index']
  #allocation1 [shape = 'u32[144,128]{1,0:T(1,128)}', space=vmem, size = 0x12000, scoped, tag = 'internal scratch']
  %s0 = inlined_call_operand.vmem [shape: f32[8,128], index: 0, kind: input, shape index: {}]
  %s1 = inlined_call_operand.vmem [shape: f32[8,128], index: 1, kind: input, shape index: {}]
  %s2 = inlined_call_operand.vmem [shape: f32[128,4], index: 2, kind: input, shape index: {}]
  %s3 = inlined_call_operand.vmem [shape: f32[8,4], index: 3, kind: output, shape index: {0}]
  %s4 = inlined_call_operand.vmem [shape: f32[1,1,128], index: 4, kind: output, shape index: {1}]
  %s5 = inlined_call_operand.vmem [shape: f32[1,1,128], index: 5, kind: output, shape index: {2}]
  %6 = xla_tuple %s3, %s4, %s5
  %s7 = sld [smem:[#allocation0]]
  $region38: #{_gmf_forward_impl.1} parent=0
    _
  %s9 = ssub.s32 1, %s7
  %s10 = scalar_select 0, %s9, %s7
  // Predicated region
  $region2: #{_gmf_forward_impl.1} parent=0 // pred_check
    _
  $region3: #{_gmf_forward_impl.1} parent=0 // pred_check_branch
    %12 = sbr.rel (0) target = $region5
  $region4: #{_gmf_forward_impl.1} parent=0 // pred_region
    _
  $region5: #{_gmf_forward_impl.1} parent=0 // pred_fallthru
    _
  // Predicated region
  $region6: #{_gmf_forward_impl.1} parent=0 // pred_check
    _
  $region7: #{_gmf_forward_impl.1} parent=0 // pred_check_branch
    %14 = sbr.rel (0) target = $region9
  $region8: #{_gmf_forward_impl.1} parent=0 // pred_region
    _
  $region9: #{_gmf_forward_impl.1} parent=0 // pred_fallthru
    _
  // Predicated region
  $region10: #{_gmf_forward_impl.1} parent=0 // pred_check
    _
  $region11: #{_gmf_forward_impl.1} parent=0 // pred_check_branch
    %16 = sbr.rel (0) target = $region13
  $region12: #{_gmf_forward_impl.1} parent=0 // pred_region
    _
  $region13: #{_gmf_forward_impl.1} parent=0 // pred_fallthru
    _
  %v17 = vld [vmem:[%s0] sm:$0xff]
  %v18 = vld [vmem:[%s1] sm:$0xff]
  %v19 = vmul.f32 %v17, %v18
  %v20 = vld [vmem:[%s2] sm:$0xff]
  %v21 = vld [vmem:[%s2 + $0x8] sm:$0xff]
  %v22 = vld [vmem:[%s2 + $0x10] sm:$0xff]
  %v23 = vld [vmem:[%s2 + $0x18] sm:$0xff]
  %v24 = vld [vmem:[%s2 + $0x20] sm:$0xff]
  %v25 = vld [vmem:[%s2 + $0x28] sm:$0xff]
  %v26 = vld [vmem:[%s2 + $0x30] sm:$0xff]
  %v27 = vld [vmem:[%s2 + $0x38] sm:$0xff]
  %v28 = vld [vmem:[%s2 + $0x40] sm:$0xff]
  %v29 = vld [vmem:[%s2 + $0x48] sm:$0xff]
  %v30 = vld [vmem:[%s2 + $0x50] sm:$0xff]
  %v31 = vld [vmem:[%s2 + $0x58] sm:$0xff]
  %v32 = vld [vmem:[%s2 + $0x60] sm:$0xff]
  %v33 = vld [vmem:[%s2 + $0x68] sm:$0xff]
  %v34 = vld [vmem:[%s2 + $0x70] sm:$0xff]
  %v35 = vld [vmem:[%s2 + $0x78] sm:$0xff]
  %36 = vmatprep.subr.mxu0 0.0
  %v37 = vand.u32 %v20, 4294901760
  %38 = vmatpush1.msra.mxu0 %v37
  %39 = vmatprep.subr.mxu0 0.0
  %v40 = vand.u32 %v21, 4294901760
  %41 = vmatpush1.msra.mxu0 %v40
  %42 = vmatprep.subr.mxu0 0.0
  %v43 = vand.u32 %v22, 4294901760
  %44 = vmatpush1.msra.mxu0 %v43
  %45 = vmatprep.subr.mxu0 0.0
  %v46 = vand.u32 %v23, 4294901760
  %47 = vmatpush1.msra.mxu0 %v46
  %48 = vmatprep.subr.mxu0 0.0
  %v49 = vand.u32 %v24, 4294901760
  %50 = vmatpush1.msra.mxu0 %v49
  %51 = vmatprep.subr.mxu0 0.0
  %v52 = vand.u32 %v25, 4294901760
  %53 = vmatpush1.msra.mxu0 %v52
  %54 = vmatprep.subr.mxu0 0.0
  %v55 = vand.u32 %v26, 4294901760
  %56 = vmatpush1.msra.mxu0 %v55
  %57 = vmatprep.subr.mxu0 0.0
  %v58 = vand.u32 %v27, 4294901760
  %59 = vmatpush1.msra.mxu0 %v58
  %60 = vmatprep.subr.mxu0 0.0
  %v61 = vand.u32 %v28, 4294901760
  %62 = vmatpush1.msra.mxu0 %v61
  %63 = vmatprep.subr.mxu0 0.0
  %v64 = vand.u32 %v29, 4294901760
  %65 = vmatpush1.msra.mxu0 %v64
  %66 = vmatprep.subr.mxu0 0.0
  %v67 = vand.u32 %v30, 4294901760
  %68 = vmatpush1.msra.mxu0 %v67
  %69 = vmatprep.subr.mxu0 0.0
  %v70 = vand.u32 %v31, 4294901760
  %71 = vmatpush1.msra.mxu0 %v70
  %72 = vmatprep.subr.mxu0 0.0
  %v73 = vand.u32 %v32, 4294901760
  %74 = vmatpush1.msra.mxu0 %v73
  %75 = vmatprep.subr.mxu0 0.0
  %v76 = vand.u32 %v33, 4294901760
  %77 = vmatpush1.msra.mxu0 %v76
  %78 = vmatprep.subr.mxu0 0.0
  %v79 = vand.u32 %v34, 4294901760
  %80 = vmatpush1.msra.mxu0 %v79
  %81 = vmatprep.subr.mxu0 0.0
  %v82 = vand.u32 %v35, 4294901760
  %83 = vmatpush1.msra.mxu0 %v82
  %84 = vmatprep.subr.mxu0 0.0
  %85 = vmatpush1.msra.mxu0 0.0
  %86 = vmatprep.subr.mxu0 0.0
  %87 = vmatpush1.msra.mxu0 0.0
  %88 = vmatprep.subr.mxu0 0.0
  %89 = vmatpush1.msra.mxu0 0.0
  %90 = vmatprep.subr.mxu0 0.0
  %91 = vmatpush1.msra.mxu0 0.0
  %92 = vmatprep.subr.mxu0 0.0
  %93 = vmatpush1.msra.mxu0 0.0
  %94 = vmatprep.subr.mxu0 0.0
  %95 = vmatpush1.msra.mxu0 0.0
  %96 = vmatprep.subr.mxu0 0.0
  %97 = vmatpush1.msra.mxu0 0.0
  %98 = vmatprep.subr.mxu0 0.0
  %99 = vmatpush1.msra.mxu0 0.0
  %100 = vmatprep.subr.mxu0 0.0
  %101 = vmatpush1.msra.mxu0 0.0
  %102 = vmatprep.subr.mxu0 0.0
  %103 = vmatpush1.msra.mxu0 0.0
  %104 = vmatprep.subr.mxu0 0.0
  %105 = vmatpush1.msra.mxu0 0.0
  %106 = vmatprep.subr.mxu0 0.0
  %107 = vmatpush1.msra.mxu0 0.0
  %108 = vmatprep.subr.mxu0 0.0
  %109 = vmatpush1.msra.mxu0 0.0
  %110 = vmatprep.subr.mxu0 0.0
  %111 = vmatpush1.msra.mxu0 0.0
  %112 = vmatprep.subr.mxu0 0.0
  %113 = vmatpush1.msra.mxu0 0.0
  %114 = vmatprep.subr.mxu0 0.0
  %115 = vmatpush1.msra.mxu0 0.0
  %116 = vmatprep.mubr.f32.mxu0 0.0
  %v117 = vand.u32 %v19, 4294901760
  %v118 = vsub.f32 %v19, %v117
  %v119 = vand.u32 %v118, 4294901760
  %v120 = vsub.f32 %v118, %v119
  %v121 = vand.u32 %v120, 4294901760
  %122 = vmatmul.mubr.f32.gmra.mrb[0].mxu0 %v121
  %v123 = vpop.f32.mrb[0].mxu0
  %v124 = vadd.f32 0.0, %v123
  %v125 = vpop.f32.mrb[0].mxu0
  %126 = vdwg.mxu0
  %127 = vmatprep.subr.mxu0 0.0
  %v128 = vand.u32 %v20, 4294901760
  %v129 = vsub.f32 %v20, %v128
  %v130 = vand.u32 %v129, 4294901760
  %v131 = vsub.f32 %v129, %v130
  %v132 = vand.u32 %v131, 4294901760
  %133 = vmatpush1.msra.mxu0 %v132
  %134 = vmatprep.subr.mxu0 0.0
  %v135 = vand.u32 %v21, 4294901760
  %v136 = vsub.f32 %v21, %v135
  %v137 = vand.u32 %v136, 4294901760
  %v138 = vsub.f32 %v136, %v137
  %v139 = vand.u32 %v138, 4294901760
  %140 = vmatpush1.msra.mxu0 %v139
  %141 = vmatprep.subr.mxu0 0.0
  %v142 = vand.u32 %v22, 4294901760
  %v143 = vsub.f32 %v22, %v142
  %v144 = vand.u32 %v143, 4294901760
  %v145 = vsub.f32 %v143, %v144
  %v146 = vand.u32 %v145, 4294901760
  %147 = vmatpush1.msra.mxu0 %v146
  %148 = vmatprep.subr.mxu0 0.0
  %v149 = vand.u32 %v23, 4294901760
  %v150 = vsub.f32 %v23, %v149
  %v151 = vand.u32 %v150, 4294901760
  %v152 = vsub.f32 %v150, %v151
  %v153 = vand.u32 %v152, 4294901760
  %154 = vmatpush1.msra.mxu0 %v153
  %155 = vmatprep.subr.mxu0 0.0
  %v156 = vand.u32 %v24, 4294901760
  %v157 = vsub.f32 %v24, %v156
  %v158 = vand.u32 %v157, 4294901760
  %v159 = vsub.f32 %v157, %v158
  %v160 = vand.u32 %v159, 4294901760
  %161 = vmatpush1.msra.mxu0 %v160
  %162 = vmatprep.subr.mxu0 0.0
  %v163 = vand.u32 %v25, 4294901760
  %v164 = vsub.f32 %v25, %v163
  %v165 = vand.u32 %v164, 4294901760
  %v166 = vsub.f32 %v164, %v165
  %v167 = vand.u32 %v166, 4294901760
  %168 = vmatpush1.msra.mxu0 %v167
  %169 = vmatprep.subr.mxu0 0.0
  %v170 = vand.u32 %v26, 4294901760
  %v171 = vsub.f32 %v26, %v170
  %v172 = vand.u32 %v171, 4294901760
  %v173 = vsub.f32 %v171, %v172
  %v174 = vand.u32 %v173, 4294901760
  %175 = vmatpush1.msra.mxu0 %v174
  %176 = vmatprep.subr.mxu0 0.0
  %v177 = vand.u32 %v27, 4294901760
  %v178 = vsub.f32 %v27, %v177
  %v179 = vand.u32 %v178, 4294901760
  %v180 = vsub.f32 %v178, %v179
  %v181 = vand.u32 %v180, 4294901760
  %182 = vmatpush1.msra.mxu0 %v181
  %183 = vmatprep.subr.mxu0 0.0
  %v184 = vand.u32 %v28, 4294901760
  %v185 = vsub.f32 %v28, %v184
  %v186 = vand.u32 %v185, 4294901760
  %v187 = vsub.f32 %v185, %v186
  %v188 = vand.u32 %v187, 4294901760
  %189 = vmatpush1.msra.mxu0 %v188
  %190 = vmatprep.subr.mxu0 0.0
  %v191 = vand.u32 %v29, 4294901760
  %v192 = vsub.f32 %v29, %v191
  %v193 = vand.u32 %v192, 4294901760
  %v194 = vsub.f32 %v192, %v193
  %v195 = vand.u32 %v194, 4294901760
  %196 = vmatpush1.msra.mxu0 %v195
  %197 = vmatprep.subr.mxu0 0.0
  %v198 = vand.u32 %v30, 4294901760
  %v199 = vsub.f32 %v30, %v198
  %v200 = vand.u32 %v199, 4294901760
  %v201 = vsub.f32 %v199, %v200
  %v202 = vand.u32 %v201, 4294901760
  %203 = vmatpush1.msra.mxu0 %v202
  %204 = vmatprep.subr.mxu0 0.0
  %v205 = vand.u32 %v31, 4294901760
  %v206 = vsub.f32 %v31, %v205
  %v207 = vand.u32 %v206, 4294901760
  %v208 = vsub.f32 %v206, %v207
  %v209 = vand.u32 %v208, 4294901760
  %210 = vmatpush1.msra.mxu0 %v209
  %211 = vmatprep.subr.mxu0 0.0
  %v212 = vand.u32 %v32, 4294901760
  %v213 = vsub.f32 %v32, %v212
  %v214 = vand.u32 %v213, 4294901760
  %v215 = vsub.f32 %v213, %v214
  %v216 = vand.u32 %v215, 4294901760
  %217 = vmatpush1.msra.mxu0 %v216
  %218 = vmatprep.subr.mxu0 0.0
  %v219 = vand.u32 %v33, 4294901760
  %v220 = vsub.f32 %v33, %v219
  %v221 = vand.u32 %v220, 4294901760
  %v222 = vsub.f32 %v220, %v221
  %v223 = vand.u32 %v222, 4294901760
  %224 = vmatpush1.msra.mxu0 %v223
  %225 = vmatprep.subr.mxu0 0.0
  %v226 = vand.u32 %v34, 4294901760
  %v227 = vsub.f32 %v34, %v226
  %v228 = vand.u32 %v227, 4294901760
  %v229 = vsub.f32 %v227, %v228
  %v230 = vand.u32 %v229, 4294901760
  %231 = vmatpush1.msra.mxu0 %v230
  %232 = vmatprep.subr.mxu0 0.0
  %v233 = vand.u32 %v35, 4294901760
  %v234 = vsub.f32 %v35, %v233
  %v235 = vand.u32 %v234, 4294901760
  %v236 = vsub.f32 %v234, %v235
  %v237 = vand.u32 %v236, 4294901760
  %238 = vmatpush1.msra.mxu0 %v237
  %239 = vmatprep.subr.mxu0 0.0
  %240 = vmatpush1.msra.mxu0 0.0
  %241 = vmatprep.subr.mxu0 0.0
  %242 = vmatpush1.msra.mxu0 0.0
  %243 = vmatprep.subr.mxu0 0.0
  %244 = vmatpush1.msra.mxu0 0.0
  %245 = vmatprep.subr.mxu0 0.0
  %246 = vmatpush1.msra.mxu0 0.0
  %247 = vmatprep.subr.mxu0 0.0
  %248 = vmatpush1.msra.mxu0 0.0
  %249 = vmatprep.subr.mxu0 0.0
  %250 = vmatpush1.msra.mxu0 0.0
  %251 = vmatprep.subr.mxu0 0.0
  %252 = vmatpush1.msra.mxu0 0.0
  %253 = vmatprep.subr.mxu0 0.0
  %254 = vmatpush1.msra.mxu0 0.0
  %255 = vmatprep.subr.mxu0 0.0
  %256 = vmatpush1.msra.mxu0 0.0
  %257 = vmatprep.subr.mxu0 0.0
  %258 = vmatpush1.msra.mxu0 0.0
  %259 = vmatprep.subr.mxu0 0.0
  %260 = vmatpush1.msra.mxu0 0.0
  %261 = vmatprep.subr.mxu0 0.0
  %262 = vmatpush1.msra.mxu0 0.0
  %263 = vmatprep.subr.mxu0 0.0
  %264 = vmatpush1.msra.mxu0 0.0
  %265 = vmatprep.subr.mxu0 0.0
  %266 = vmatpush1.msra.mxu0 0.0
  %267 = vmatprep.subr.mxu0 0.0
  %268 = vmatpush1.msra.mxu0 0.0
  %269 = vmatprep.subr.mxu0 0.0
  %270 = vmatpush1.msra.mxu0 0.0
  %271 = vmatprep.mubr.f32.mxu0 0.0
  %v272 = vand.u32 %v19, 4294901760
  %273 = vmatmul.mubr.f32.gmra.mrb[0].mxu0 %v272
  %v274 = vpop.f32.mrb[0].mxu0
  %v275 = vadd.f32 %v124, %v274
  %v276 = vpop.f32.mrb[0].mxu0
  %277 = vdwg.mxu0
  %278 = vmatprep.subr.mxu0 0.0
  %v279 = vand.u32 %v20, 4294901760
  %v280 = vsub.f32 %v20, %v279
  %281 = vmatpush1.msra.mxu0 %v280
  %282 = vmatprep.subr.mxu0 0.0
  %v283 = vand.u32 %v21, 4294901760
  %v284 = vsub.f32 %v21, %v283
  %285 = vmatpush1.msra.mxu0 %v284
  %286 = vmatprep.subr.mxu0 0.0
  %v287 = vand.u32 %v22, 4294901760
  %v288 = vsub.f32 %v22, %v287
  %289 = vmatpush1.msra.mxu0 %v288
  %290 = vmatprep.subr.mxu0 0.0
  %v291 = vand.u32 %v23, 4294901760
  %v292 = vsub.f32 %v23, %v291
  %293 = vmatpush1.msra.mxu0 %v292
  %294 = vmatprep.subr.mxu0 0.0
  %v295 = vand.u32 %v24, 4294901760
  %v296 = vsub.f32 %v24, %v295
  %297 = vmatpush1.msra.mxu0 %v296
  %298 = vmatprep.subr.mxu0 0.0
  %v299 = vand.u32 %v25, 4294901760
  %v300 = vsub.f32 %v25, %v299
  %301 = vmatpush1.msra.mxu0 %v300
  %302 = vmatprep.subr.mxu0 0.0
  %v303 = vand.u32 %v26, 4294901760
  %v304 = vsub.f32 %v26, %v303
  %305 = vmatpush1.msra.mxu0 %v304
  %306 = vmatprep.subr.mxu0 0.0
  %v307 = vand.u32 %v27, 4294901760
  %v308 = vsub.f32 %v27, %v307
  %309 = vmatpush1.msra.mxu0 %v308
  %310 = vmatprep.subr.mxu0 0.0
  %v311 = vand.u32 %v28, 4294901760
  %v312 = vsub.f32 %v28, %v311
  %313 = vmatpush1.msra.mxu0 %v312
  %314 = vmatprep.subr.mxu0 0.0
  %v315 = vand.u32 %v29, 4294901760
  %v316 = vsub.f32 %v29, %v315
  %317 = vmatpush1.msra.mxu0 %v316
  %318 = vmatprep.subr.mxu0 0.0
  %v319 = vand.u32 %v30, 4294901760
  %v320 = vsub.f32 %v30, %v319
  %321 = vmatpush1.msra.mxu0 %v320
  %322 = vmatprep.subr.mxu0 0.0
  %v323 = vand.u32 %v31, 4294901760
  %v324 = vsub.f32 %v31, %v323
  %325 = vmatpush1.msra.mxu0 %v324
  %326 = vmatprep.subr.mxu0 0.0
  %v327 = vand.u32 %v32, 4294901760
  %v328 = vsub.f32 %v32, %v327
  %329 = vmatpush1.msra.mxu0 %v328
  %330 = vmatprep.subr.mxu0 0.0
  %v331 = vand.u32 %v33, 4294901760
  %v332 = vsub.f32 %v33, %v331
  %333 = vmatpush1.msra.mxu0 %v332
  %334 = vmatprep.subr.mxu0 0.0
  %v335 = vand.u32 %v34, 4294901760
  %v336 = vsub.f32 %v34, %v335
  %337 = vmatpush1.msra.mxu0 %v336
  %338 = vmatprep.subr.mxu0 0.0
  %v339 = vand.u32 %v35, 4294901760
  %v340 = vsub.f32 %v35, %v339
  %341 = vmatpush1.msra.mxu0 %v340
  %342 = vmatprep.subr.mxu0 0.0
  %343 = vmatpush1.msra.mxu0 0.0
  %344 = vmatprep.subr.mxu0 0.0
  %345 = vmatpush1.msra.mxu0 0.0
  %346 = vmatprep.subr.mxu0 0.0
  %347 = vmatpush1.msra.mxu0 0.0
  %348 = vmatprep.subr.mxu0 0.0
  %349 = vmatpush1.msra.mxu0 0.0
  %350 = vmatprep.subr.mxu0 0.0
  %351 = vmatpush1.msra.mxu0 0.0
  %352 = vmatprep.subr.mxu0 0.0
  %353 = vmatpush1.msra.mxu0 0.0
  %354 = vmatprep.subr.mxu0 0.0
  %355 = vmatpush1.msra.mxu0 0.0
  %356 = vmatprep.subr.mxu0 0.0
  %357 = vmatpush1.msra.mxu0 0.0
  %358 = vmatprep.subr.mxu0 0.0
  %359 = vmatpush1.msra.mxu0 0.0
  %360 = vmatprep.subr.mxu0 0.0
  %361 = vmatpush1.msra.mxu0 0.0
  %362 = vmatprep.subr.mxu0 0.0
  %363 = vmatpush1.msra.mxu0 0.0
  %364 = vmatprep.subr.mxu0 0.0
  %365 = vmatpush1.msra.mxu0 0.0
  %366 = vmatprep.subr.mxu0 0.0
  %367 = vmatpush1.msra.mxu0 0.0
  %368 = vmatprep.subr.mxu0 0.0
  %369 = vmatpush1.msra.mxu0 0.0
  %370 = vmatprep.subr.mxu0 0.0
  %371 = vmatpush1.msra.mxu0 0.0
  %372 = vmatprep.subr.mxu0 0.0
  %373 = vmatpush1.msra.mxu0 0.0
  %374 = vmatprep.mubr.f32.mxu0 0.0
  %v375 = vand.u32 %v19, 4294901760
  %v376 = vsub.f32 %v19, %v375
  %377 = vmatmul.mubr.f32.gmra.mrb[0].mxu0 %v376
  %v378 = vpop.f32.mrb[0].mxu0
  %v379 = vadd.f32 %v275, %v378
  %v380 = vpop.f32.mrb[0].mxu0
  %381 = vdwg.mxu0
  %382 = vmatprep.subr.mxu0 0.0
  %v383 = vand.u32 %v20, 4294901760
  %384 = vmatpush1.msra.mxu0 %v383
  %385 = vmatprep.subr.mxu0 0.0
  %v386 = vand.u32 %v21, 4294901760
  %387 = vmatpush1.msra.mxu0 %v386
  %388 = vmatprep.subr.mxu0 0.0
  %v389 = vand.u32 %v22, 4294901760
  %390 = vmatpush1.msra.mxu0 %v389
  %391 = vmatprep.subr.mxu0 0.0
  %v392 = vand.u32 %v23, 4294901760
  %393 = vmatpush1.msra.mxu0 %v392
  %394 = vmatprep.subr.mxu0 0.0
  %v395 = vand.u32 %v24, 4294901760
  %396 = vmatpush1.msra.mxu0 %v395
  %397 = vmatprep.subr.mxu0 0.0
  %v398 = vand.u32 %v25, 4294901760
  %399 = vmatpush1.msra.mxu0 %v398
  %400 = vmatprep.subr.mxu0 0.0
  %v401 = vand.u32 %v26, 4294901760
  %402 = vmatpush1.msra.mxu0 %v401
  %403 = vmatprep.subr.mxu0 0.0
  %v404 = vand.u32 %v27, 4294901760
  %405 = vmatpush1.msra.mxu0 %v404
  %406 = vmatprep.subr.mxu0 0.0
  %v407 = vand.u32 %v28, 4294901760
  %408 = vmatpush1.msra.mxu0 %v407
  %409 = vmatprep.subr.mxu0 0.0
  %v410 = vand.u32 %v29, 4294901760
  %411 = vmatpush1.msra.mxu0 %v410
  %412 = vmatprep.subr.mxu0 0.0
  %v413 = vand.u32 %v30, 4294901760
  %414 = vmatpush1.msra.mxu0 %v413
  %415 = vmatprep.subr.mxu0 0.0
  %v416 = vand.u32 %v31, 4294901760
  %417 = vmatpush1.msra.mxu0 %v416
  %418 = vmatprep.subr.mxu0 0.0
  %v419 = vand.u32 %v32, 4294901760
  %420 = vmatpush1.msra.mxu0 %v419
  %421 = vmatprep.subr.mxu0 0.0
  %v422 = vand.u32 %v33, 4294901760
  %423 = vmatpush1.msra.mxu0 %v422
  %424 = vmatprep.subr.mxu0 0.0
  %v425 = vand.u32 %v34, 4294901760
  %426 = vmatpush1.msra.mxu0 %v425
  %427 = vmatprep.subr.mxu0 0.0
  %v428 = vand.u32 %v35, 4294901760
  %429 = vmatpush1.msra.mxu0 %v428
  %430 = vmatprep.subr.mxu0 0.0
  %431 = vmatpush1.msra.mxu0 0.0
  %432 = vmatprep.subr.mxu0 0.0
  %433 = vmatpush1.msra.mxu0 0.0
  %434 = vmatprep.subr.mxu0 0.0
  %435 = vmatpush1.msra.mxu0 0.0
  %436 = vmatprep.subr.mxu0 0.0
  %437 = vmatpush1.msra.mxu0 0.0
  %438 = vmatprep.subr.mxu0 0.0
  %439 = vmatpush1.msra.mxu0 0.0
  %440 = vmatprep.subr.mxu0 0.0
  %441 = vmatpush1.msra.mxu0 0.0
  %442 = vmatprep.subr.mxu0 0.0
  %443 = vmatpush1.msra.mxu0 0.0
  %444 = vmatprep.subr.mxu0 0.0
  %445 = vmatpush1.msra.mxu0 0.0
  %446 = vmatprep.subr.mxu0 0.0
  %447 = vmatpush1.msra.mxu0 0.0
  %448 = vmatprep.subr.mxu0 0.0
  %449 = vmatpush1.msra.mxu0 0.0
  %450 = vmatprep.subr.mxu0 0.0
  %451 = vmatpush1.msra.mxu0 0.0
  %452 = vmatprep.subr.mxu0 0.0
  %453 = vmatpush1.msra.mxu0 0.0
  %454 = vmatprep.subr.mxu0 0.0
  %455 = vmatpush1.msra.mxu0 0.0
  %456 = vmatprep.subr.mxu0 0.0
  %457 = vmatpush1.msra.mxu0 0.0
  %458 = vmatprep.subr.mxu0 0.0
  %459 = vmatpush1.msra.mxu0 0.0
  %460 = vmatprep.subr.mxu0 0.0
  %461 = vmatpush1.msra.mxu0 0.0
  %462 = vmatprep.mubr.f32.mxu0 0.0
  %v463 = vand.u32 %v19, 4294901760
  %v464 = vsub.f32 %v19, %v463
  %v465 = vand.u32 %v464, 4294901760
  %466 = vmatmul.mubr.f32.gmra.mrb[0].mxu0 %v465
  %v467 = vpop.f32.mrb[0].mxu0
  %v468 = vadd.f32 %v379, %v467
  %v469 = vpop.f32.mrb[0].mxu0
  %470 = vdwg.mxu0
  %471 = vmatprep.subr.mxu0 0.0
  %v472 = vand.u32 %v20, 4294901760
  %v473 = vsub.f32 %v20, %v472
  %v474 = vand.u32 %v473, 4294901760
  %475 = vmatpush1.msra.mxu0 %v474
  %476 = vmatprep.subr.mxu0 0.0
  %v477 = vand.u32 %v21, 4294901760
  %v478 = vsub.f32 %v21, %v477
  %v479 = vand.u32 %v478, 4294901760
  %480 = vmatpush1.msra.mxu0 %v479
  %481 = vmatprep.subr.mxu0 0.0
  %v482 = vand.u32 %v22, 4294901760
  %v483 = vsub.f32 %v22, %v482
  %v484 = vand.u32 %v483, 4294901760
  %485 = vmatpush1.msra.mxu0 %v484
  %486 = vmatprep.subr.mxu0 0.0
  %v487 = vand.u32 %v23, 4294901760
  %v488 = vsub.f32 %v23, %v487
  %v489 = vand.u32 %v488, 4294901760
  %490 = vmatpush1.msra.mxu0 %v489
  %491 = vmatprep.subr.mxu0 0.0
  %v492 = vand.u32 %v24, 4294901760
  %v493 = vsub.f32 %v24, %v492
  %v494 = vand.u32 %v493, 4294901760
  %495 = vmatpush1.msra.mxu0 %v494
  %496 = vmatprep.subr.mxu0 0.0
  %v497 = vand.u32 %v25, 4294901760
  %v498 = vsub.f32 %v25, %v497
  %v499 = vand.u32 %v498, 4294901760
  %500 = vmatpush1.msra.mxu0 %v499
  %501 = vmatprep.subr.mxu0 0.0
  %v502 = vand.u32 %v26, 4294901760
  %v503 = vsub.f32 %v26, %v502
  %v504 = vand.u32 %v503, 4294901760
  %505 = vmatpush1.msra.mxu0 %v504
  %506 = vmatprep.subr.mxu0 0.0
  %v507 = vand.u32 %v27, 4294901760
  %v508 = vsub.f32 %v27, %v507
  %v509 = vand.u32 %v508, 4294901760
  %510 = vmatpush1.msra.mxu0 %v509
  %511 = vmatprep.subr.mxu0 0.0
  %v512 = vand.u32 %v28, 4294901760
  %v513 = vsub.f32 %v28, %v512
  %v514 = vand.u32 %v513, 4294901760
  %515 = vmatpush1.msra.mxu0 %v514
  %516 = vmatprep.subr.mxu0 0.0
  %v517 = vand.u32 %v29, 4294901760
  %v518 = vsub.f32 %v29, %v517
  %v519 = vand.u32 %v518, 4294901760
  %520 = vmatpush1.msra.mxu0 %v519
  %521 = vmatprep.subr.mxu0 0.0
  %v522 = vand.u32 %v30, 4294901760
  %v523 = vsub.f32 %v30, %v522
  %v524 = vand.u32 %v523, 4294901760
  %525 = vmatpush1.msra.mxu0 %v524
  %526 = vmatprep.subr.mxu0 0.0
  %v527 = vand.u32 %v31, 4294901760
  %v528 = vsub.f32 %v31, %v527
  %v529 = vand.u32 %v528, 4294901760
  %530 = vmatpush1.msra.mxu0 %v529
  %531 = vmatprep.subr.mxu0 0.0
  %v532 = vand.u32 %v32, 4294901760
  %v533 = vsub.f32 %v32, %v532
  %v534 = vand.u32 %v533, 4294901760
  %535 = vmatpush1.msra.mxu0 %v534
  %536 = vmatprep.subr.mxu0 0.0
  %v537 = vand.u32 %v33, 4294901760
  %v538 = vsub.f32 %v33, %v537
  %v539 = vand.u32 %v538, 4294901760
  %540 = vmatpush1.msra.mxu0 %v539
  %541 = vmatprep.subr.mxu0 0.0
  %v542 = vand.u32 %v34, 4294901760
  %v543 = vsub.f32 %v34, %v542
  %v544 = vand.u32 %v543, 4294901760
  %545 = vmatpush1.msra.mxu0 %v544
  %546 = vmatprep.subr.mxu0 0.0
  %v547 = vand.u32 %v35, 4294901760
  %v548 = vsub.f32 %v35, %v547
  %v549 = vand.u32 %v548, 4294901760
  %550 = vmatpush1.msra.mxu0 %v549
  %551 = vmatprep.subr.mxu0 0.0
  %552 = vmatpush1.msra.mxu0 0.0
  %553 = vmatprep.subr.mxu0 0.0
  %554 = vmatpush1.msra.mxu0 0.0
  %555 = vmatprep.subr.mxu0 0.0
  %556 = vmatpush1.msra.mxu0 0.0
  %557 = vmatprep.subr.mxu0 0.0
  %558 = vmatpush1.msra.mxu0 0.0
  %559 = vmatprep.subr.mxu0 0.0
  %560 = vmatpush1.msra.mxu0 0.0
  %561 = vmatprep.subr.mxu0 0.0
  %562 = vmatpush1.msra.mxu0 0.0
  %563 = vmatprep.subr.mxu0 0.0
  %564 = vmatpush1.msra.mxu0 0.0
  %565 = vmatprep.subr.mxu0 0.0
  %566 = vmatpush1.msra.mxu0 0.0
  %567 = vmatprep.subr.mxu0 0.0
  %568 = vmatpush1.msra.mxu0 0.0
  %569 = vmatprep.subr.mxu0 0.0
  %570 = vmatpush1.msra.mxu0 0.0
  %571 = vmatprep.subr.mxu0 0.0
  %572 = vmatpush1.msra.mxu0 0.0
  %573 = vmatprep.subr.mxu0 0.0
  %574 = vmatpush1.msra.mxu0 0.0
  %575 = vmatprep.subr.mxu0 0.0
  %576 = vmatpush1.msra.mxu0 0.0
  %577 = vmatprep.subr.mxu0 0.0
  %578 = vmatpush1.msra.mxu0 0.0
  %579 = vmatprep.subr.mxu0 0.0
  %580 = vmatpush1.msra.mxu0 0.0
  %581 = vmatprep.subr.mxu0 0.0
  %582 = vmatpush1.msra.mxu0 0.0
  %583 = vmatprep.mubr.f32.mxu0 0.0
  %v584 = vand.u32 %v19, 4294901760
  %585 = vmatmul.mubr.f32.gmra.mrb[0].mxu0 %v584
  %v586 = vpop.f32.mrb[0].mxu0
  %v587 = vadd.f32 %v468, %v586
  %v588 = vpop.f32.mrb[0].mxu0
  %589 = vdwg.mxu0
  %590 = vmatprep.subr.mxu0 0.0
  %v591 = vand.u32 %v20, 4294901760
  %592 = vmatpush1.msra.mxu0 %v591
  %593 = vmatprep.subr.mxu0 0.0
  %v594 = vand.u32 %v21, 4294901760
  %595 = vmatpush1.msra.mxu0 %v594
  %596 = vmatprep.subr.mxu0 0.0
  %v597 = vand.u32 %v22, 4294901760
  %598 = vmatpush1.msra.mxu0 %v597
  %599 = vmatprep.subr.mxu0 0.0
  %v600 = vand.u32 %v23, 4294901760
  %601 = vmatpush1.msra.mxu0 %v600
  %602 = vmatprep.subr.mxu0 0.0
  %v603 = vand.u32 %v24, 4294901760
  %604 = vmatpush1.msra.mxu0 %v603
  %605 = vmatprep.subr.mxu0 0.0
  %v606 = vand.u32 %v25, 4294901760
  %607 = vmatpush1.msra.mxu0 %v606
  %608 = vmatprep.subr.mxu0 0.0
  %v609 = vand.u32 %v26, 4294901760
  %610 = vmatpush1.msra.mxu0 %v609
  %611 = vmatprep.subr.mxu0 0.0
  %v612 = vand.u32 %v27, 4294901760
  %613 = vmatpush1.msra.mxu0 %v612
  %614 = vmatprep.subr.mxu0 0.0
  %v615 = vand.u32 %v28, 4294901760
  %616 = vmatpush1.msra.mxu0 %v615
  %617 = vmatprep.subr.mxu0 0.0
  %v618 = vand.u32 %v29, 4294901760
  %619 = vmatpush1.msra.mxu0 %v618
  %620 = vmatprep.subr.mxu0 0.0
  %v621 = vand.u32 %v30, 4294901760
  %622 = vmatpush1.msra.mxu0 %v621
  %623 = vmatprep.subr.mxu0 0.0
  %v624 = vand.u32 %v31, 4294901760
  %625 = vmatpush1.msra.mxu0 %v624
  %626 = vmatprep.subr.mxu0 0.0
  %v627 = vand.u32 %v32, 4294901760
  %628 = vmatpush1.msra.mxu0 %v627
  %629 = vmatprep.subr.mxu0 0.0
  %v630 = vand.u32 %v33, 4294901760
  %631 = vmatpush1.msra.mxu0 %v630
  %632 = vmatprep.subr.mxu0 0.0
  %v633 = vand.u32 %v34, 4294901760
  %634 = vmatpush1.msra.mxu0 %v633
  %635 = vmatprep.subr.mxu0 0.0
  %v636 = vand.u32 %v35, 4294901760
  %637 = vmatpush1.msra.mxu0 %v636
  %638 = vmatprep.subr.mxu0 0.0
  %639 = vmatpush1.msra.mxu0 0.0
  %640 = vmatprep.subr.mxu0 0.0
  %641 = vmatpush1.msra.mxu0 0.0
  %642 = vmatprep.subr.mxu0 0.0
  %643 = vmatpush1.msra.mxu0 0.0
  %644 = vmatprep.subr.mxu0 0.0
  %645 = vmatpush1.msra.mxu0 0.0
  %646 = vmatprep.subr.mxu0 0.0
  %647 = vmatpush1.msra.mxu0 0.0
  %648 = vmatprep.subr.mxu0 0.0
  %649 = vmatpush1.msra.mxu0 0.0
  %650 = vmatprep.subr.mxu0 0.0
  %651 = vmatpush1.msra.mxu0 0.0
  %652 = vmatprep.subr.mxu0 0.0
  %653 = vmatpush1.msra.mxu0 0.0
  %654 = vmatprep.subr.mxu0 0.0
  %655 = vmatpush1.msra.mxu0 0.0
  %656 = vmatprep.subr.mxu0 0.0
  %657 = vmatpush1.msra.mxu0 0.0
  %658 = vmatprep.subr.mxu0 0.0
  %659 = vmatpush1.msra.mxu0 0.0
  %660 = vmatprep.subr.mxu0 0.0
  %661 = vmatpush1.msra.mxu0 0.0
  %662 = vmatprep.subr.mxu0 0.0
  %663 = vmatpush1.msra.mxu0 0.0
  %664 = vmatprep.subr.mxu0 0.0
  %665 = vmatpush1.msra.mxu0 0.0
  %666 = vmatprep.subr.mxu0 0.0
  %667 = vmatpush1.msra.mxu0 0.0
  %668 = vmatprep.subr.mxu0 0.0
  %669 = vmatpush1.msra.mxu0 0.0
  %670 = vmatprep.mubr.f32.mxu0 0.0
  %v671 = vand.u32 %v19, 4294901760
  %672 = vmatmul.mubr.f32.gmra.mrb[0].mxu0 %v671
  %v673 = vpop.f32.mrb[0].mxu0
  %v674 = vadd.f32 %v587, %v673
  %v675 = vpop.f32.mrb[0].mxu0
  %676 = vdwg.mxu0
  %vm677 = vcmask 31744
  %678 = vst.msk [vmem:[%s3] sm:$0xff] %vm677, %v674
  %v679 = vmul.f32 %v17, %v17
  %v680 = vrot.slane %v679, 4
  %v681 = vadd.f32 %v679, %v680
  %v682 = vrot.slane %v681, 2
  %v683 = vadd.f32 %v681, %v682
  %v684 = vrot.slane %v683, 1
  %v685 = vadd.f32 %v683, %v684
  %686 = vst [vmem:[%s4] sm:$0x1] %v685
  %v687 = vmul.f32 %v18, %v18
  %v688 = vrot.slane %v687, 4
  %v689 = vadd.f32 %v687, %v688
  %v690 = vrot.slane %v689, 2
  %v691 = vadd.f32 %v689, %v690
  %v692 = vrot.slane %v691, 1
  %v693 = vadd.f32 %v691, %v692
  %694 = vst [vmem:[%s5] sm:$0x1] %v693
  // Predicated region
  $region14: #{_gmf_forward_impl.1} parent=0 // pred_check
    _
  $region15: #{_gmf_forward_impl.1} parent=0 // pred_check_branch
    %696 = sbr.rel (0) target = $region17
  $region16: #{_gmf_forward_impl.1} parent=0 // pred_region
    _
  $region17: #{_gmf_forward_impl.1} parent=0 // pred_fallthru
    _
  // Predicated region
  $region18: #{_gmf_forward_impl.1} parent=0 // pred_check
    _
  $region19: #{_gmf_forward_impl.1} parent=0 // pred_check_branch
    %698 = sbr.rel (0) target = $region21
  $region20: #{_gmf_forward_impl.1} parent=0 // pred_region
    _
  $region21: #{_gmf_forward_impl.1} parent=0 // pred_fallthru
    _
  // Predicated region
  $region22: #{_gmf_forward_impl.1} parent=0 // pred_check
    _
  $region23: #{_gmf_forward_impl.1} parent=0 // pred_check_branch
    %700 = sbr.rel (0) target = $region25
  $region24: #{_gmf_forward_impl.1} parent=0 // pred_region
    _
  $region25: #{_gmf_forward_impl.1} parent=0 // pred_fallthru
    _
  // Predicated region
  $region26: #{_gmf_forward_impl.1} parent=0 // pred_check
    _
  $region27: #{_gmf_forward_impl.1} parent=0 // pred_check_branch
    %702 = sbr.rel (0) target = $region29
  $region28: #{_gmf_forward_impl.1} parent=0 // pred_region
    _
  $region29: #{_gmf_forward_impl.1} parent=0 // pred_fallthru
    _
  // Predicated region
  $region30: #{_gmf_forward_impl.1} parent=0 // pred_check
    _
  $region31: #{_gmf_forward_impl.1} parent=0 // pred_check_branch
    %704 = sbr.rel (0) target = $region33
  $region32: #{_gmf_forward_impl.1} parent=0 // pred_region
    _
  $region33: #{_gmf_forward_impl.1} parent=0 // pred_fallthru
    _
  // Predicated region
  $region34: #{_gmf_forward_impl.1} parent=0 // pred_check
    _
  $region35: #{_gmf_forward_impl.1} parent=0 // pred_check_branch
    %706 = sbr.rel (0) target = $region37
  $region36: #{_gmf_forward_impl.1} parent=0 // pred_region
    _
  $region37: #{_gmf_forward_impl.1} parent=0 // pred_fallthru
    _

</llo_original>
